<compile_context>
chip_gen: v7x
topology: tpu7x:2x2x1
jax: 0.10.0
libtpu: 0.0.40
codegen_flags: <defaults>
</compile_context>

<pallas_src>
import jax
import jax.numpy as jnp
from jax.experimental import pallas as pl
from jax.experimental.pallas import tpu as pltpu  # noqa: F401  (TPU backend)


# ---------------------------------------------------------------------------
# Recommended path: the identity costs nothing and leaves XLA free to fuse
# the producers of these embeddings with their consumers.
# ---------------------------------------------------------------------------
def entity_union(axis_embeddings: jax.Array, arg_embeddings: jax.Array):
    """EntityUnion.forward — exact identity on both inputs (zero-cost path)."""
    return (axis_embeddings, arg_embeddings)


# ---------------------------------------------------------------------------
# Optional Pallas entry point (kept for API symmetry / kernel deliverable).
# ---------------------------------------------------------------------------
def _entity_union_kernel(axis_hbm_ref, arg_hbm_ref, axis_out_ref, arg_out_ref):
    # Outputs alias the inputs (input_output_aliases) and every ref stays in
    # HBM (memory_space=pl.ANY), so the output buffers already hold the input
    # data.  Nothing to move, nothing to compute: intentional no-op body.
    del axis_hbm_ref, arg_hbm_ref, axis_out_ref, arg_out_ref


def _entity_union_pallas_call(axis_embeddings: jax.Array, arg_embeddings: jax.Array):
    """Pallas identity. Zero-copy ONLY when the inputs are donated (see jit
    wrapper below); without donation XLA inserts HBM->HBM copies to satisfy
    the aliases, so prefer `entity_union` in production code."""
    out_shape = (
        jax.ShapeDtypeStruct(axis_embeddings.shape, axis_embeddings.dtype),
        jax.ShapeDtypeStruct(arg_embeddings.shape, arg_embeddings.dtype),
    )

    hbm_spec = pl.BlockSpec(memory_space=pl.ANY)  # leave data in place (HBM)

    return pl.pallas_call(
        _entity_union_kernel,
        out_shape=out_shape,
        in_specs=[hbm_spec, hbm_spec],
        out_specs=(hbm_spec, hbm_spec),
        # Alias input 0 -> output 0 and input 1 -> output 1.  Honored
        # copy-free because the jit wrapper donates both arguments.
        input_output_aliases={0: 0, 1: 1},
    )(axis_embeddings, arg_embeddings)


# Donation makes the declared aliases real (no protective copy).  Callers of
# this entry point must NOT read the original input arrays afterwards.
entity_union_pallas = jax.jit(_entity_union_pallas_call, donate_argnums=(0, 1))


if __name__ == "__main__":
    # EntityUnion.__init__(dim) stores only `dim`; there are no parameters.
    dim = 32
    batch = 8

    key = jax.random.PRNGKey(0)
    k_axis, k_arg = jax.random.split(key)
    axis_embeddings = jax.random.normal(k_axis, (batch, dim), dtype=jnp.float32)
    arg_embeddings = jax.random.normal(k_arg, (batch, dim), dtype=jnp.float32)

    # ---- 1) Recommended zero-cost path --------------------------------------
    axis_out, arg_out = entity_union(axis_embeddings, arg_embeddings)
    jax.block_until_ready((axis_out, arg_out))
    assert axis_out.shape == axis_embeddings.shape
    assert axis_out.dtype == axis_embeddings.dtype
    assert arg_out.shape == arg_embeddings.shape
    assert arg_out.dtype == arg_embeddings.dtype
    assert bool(jnp.all(axis_out == axis_embeddings))
    assert bool(jnp.all(arg_out == arg_embeddings))

    # ---- 2) Pallas entry point (inputs donated; compare vs retained refs) ---
    axis_ref = jnp.array(axis_embeddings)  # retained copies for verification
    arg_ref = jnp.array(arg_embeddings)
    axis_donated = jnp.array(axis_embeddings)  # these copies are consumed
    arg_donated = jnp.array(arg_embeddings)

    p_axis, p_arg = entity_union_pallas(axis_donated, arg_donated)
    jax.block_until_ready((p_axis, p_arg))
    assert p_axis.shape == axis_ref.shape and p_axis.dtype == axis_ref.dtype
    assert p_arg.shape == arg_ref.shape and p_arg.dtype == arg_ref.dtype
    assert bool(jnp.all(p_axis == axis_ref))
    assert bool(jnp.all(p_arg == arg_ref))

    print("KERNEL_OK")
</pallas_src>

<mosaic_0001>
module attributes {stable_mosaic.version = 11 : i64} {
  func.func @_entity_union_kernel(%arg0: memref<8x32xf32, #tpu.memory_space<any>>, %arg1: memref<8x32xf32, #tpu.memory_space<any>>, %arg2: memref<8x32xf32, #tpu.memory_space<any>>, %arg3: memref<8x32xf32, #tpu.memory_space<any>>) attributes {dimension_semantics = [], scalar_prefetch = 0 : i64, scratch_operands = 0 : i64, tpu.core_type = #tpu.core_type<tc>} {
    return
  }
}

</mosaic_0001>

<llo_original>
// kernel: _entity_union_pallas_call.1
$region0: #{_entity_union_pallas_call.1}
  #allocation0 [shape = 'u32[]', space=smem, size = 0x4, offset = 0x4, fixed_abs, tag = 'smem constant byte address 0x4 - core index']
  #allocation1 [shape = 'u32[144,128]{1,0:T(1,128)}', space=vmem, size = 0x12000, scoped, tag = 'internal scratch']
  %s0 = inlined_call_operand.hbm [shape: f32[8,32], index: 0, kind: input, shape index: {}, may-alias: {0,2}]
  %s1 = inlined_call_operand.hbm [shape: f32[8,32], index: 1, kind: input, shape index: {}, may-alias: {1,3}]
  %s2 = inlined_call_operand.hbm [shape: f32[8,32], index: 2, kind: output, shape index: {0}, may-alias: {0,2}]
  %s3 = inlined_call_operand.hbm [shape: f32[8,32], index: 3, kind: output, shape index: {1}, may-alias: {1,3}]
  %4 = xla_tuple %s2, %s3
  %s5 = sld [smem:[#allocation0]]
  $region2: #{_entity_union_pallas_call.1} parent=0
    _
  %s7 = ssub.s32 1, %s5
  %s8 = scalar_select 0, %s7, %s5

</llo_original>
